<compile_context>
chip_gen: v7x
topology: tpu7x:2x2x1
jax: 0.10.0
libtpu: 0.0.40
codegen_flags: <defaults>
</compile_context>

<pallas_src>
import functools

import jax
import jax.numpy as jnp
from jax.experimental import pallas as pl
from jax.experimental.pallas import tpu as pltpu

BN_EPS = 1e-5
LANE = 128


def _round_up(x, m):
    return (x + m - 1) // m * m


def _pad_axis(a, axis, target):
    pad = target - a.shape[axis]
    if pad == 0:
        return a
    widths = [(0, 0)] * a.ndim
    widths[axis] = (0, pad)
    return jnp.pad(a, widths)


def _sublane_pack(dtype):
    # f32 -> 8, bf16 -> 16, int8/fp8 -> 32 (sub-32-bit dtypes pack along sublanes).
    return max(8, 32 // jnp.dtype(dtype).itemsize)


def _vmem_budget_bytes():
    try:
        cap = pltpu.get_tpu_info().vmem_capacity_bytes   # 64 MiB v7x, 128 MiB v5e/v6e
    except Exception:
        cap = 64 * 1024 * 1024                           # conservative fallback
    return min(int(cap) * 3 // 4, 100 * 1024 * 1024)


# ---------------------------------------------------------------------------
# Fast path: whole problem resident in VMEM, single grid step.
# ---------------------------------------------------------------------------
def _mlp_fused_kernel(x_ref, w1_ref, w2_ref, gamma_ref, beta_ref, o_ref, *, n_true):
    # Linear 1 on the MXU (native-dtype operands, f32 accumulation) - computed ONCE.
    h = jnp.dot(x_ref[...], w1_ref[...], preferred_element_type=jnp.float32)

    n_p = x_ref.shape[0]
    inv_n = 1.0 / n_true
    # Two-pass batch statistics (padded rows are zero, so they do not perturb
    # the sums; the centered pass is masked so padding does not bias the var).
    mean = jnp.sum(h, axis=0, keepdims=True) * inv_n
    row = jax.lax.broadcasted_iota(jnp.int32, (n_p, 1), 0)
    mask = (row < n_true).astype(jnp.float32)
    centered = (h - mean) * mask
    var = jnp.sum(centered * centered, axis=0, keepdims=True) * inv_n  # biased (training)

    inv_std = jax.lax.rsqrt(var + BN_EPS)                 # EUP slot
    scale = gamma_ref[...] * inv_std                      # (1, H) folded BN scale
    shift = beta_ref[...] - mean * scale                  # (1, H) folded BN shift
    h_act = jnp.maximum(h * scale + shift, 0.0)           # fused BN + ReLU

    out = jnp.dot(h_act.astype(w2_ref.dtype), w2_ref[...],
                  preferred_element_type=jnp.float32)
    o_ref[...] = out.astype(o_ref.dtype)


# ---------------------------------------------------------------------------
# Tiled path: grid = (phase, batch-tile).  Phase 0 computes h per tile, caches
# it in VMEM and accumulates per-feature sum / sum-of-squares.  Phase 1 (tile 0)
# folds BN into a (1,H) scale/shift, then every phase-1 tile does FMA + ReLU +
# second GEMM reading the cached h.
# ---------------------------------------------------------------------------
def _mlp_tiled_kernel(x_ref, w1_ref, w2_ref, gamma_ref, beta_ref, o_ref,
                      h_cache_ref, sum_ref, sumsq_ref, *, n_true, cache_h):
    phase = pl.program_id(0)   # 0: stats (+ h cache), 1: normalize + output
    tile = pl.program_id(1)    # batch-tile index

    @pl.when((phase == 0) & (tile == 0))
    def _init():
        sum_ref[...] = jnp.zeros_like(sum_ref)
        sumsq_ref[...] = jnp.zeros_like(sumsq_ref)

    @pl.when(phase == 0)
    def _stats():
        h = jnp.dot(x_ref[...], w1_ref[...], preferred_element_type=jnp.float32)
        if cache_h:
            h_cache_ref[tile] = h          # persist for phase 1 (no recompute)
        sum_ref[...] += jnp.sum(h, axis=0, keepdims=True)
        sumsq_ref[...] += jnp.sum(h * h, axis=0, keepdims=True)

    @pl.when((phase == 1) & (tile == 0))
    def _fold():
        # Fold BN once; reuse the stats scratches to hold scale / shift.
        inv_n = 1.0 / n_true
        mean = sum_ref[...] * inv_n
        var = jnp.maximum(sumsq_ref[...] * inv_n - mean * mean, 0.0)
        inv_std = jax.lax.rsqrt(var + BN_EPS)
        scale = gamma_ref[...] * inv_std
        shift = beta_ref[...] - mean * scale
        sum_ref[...] = scale
        sumsq_ref[...] = shift

    @pl.when(phase == 1)
    def _emit():
        if cache_h:
            h = h_cache_ref[tile]
        else:
            # VMEM-constrained fallback: recompute h (x is re-streamed).
            h = jnp.dot(x_ref[...], w1_ref[...], preferred_element_type=jnp.float32)
        h_act = jnp.maximum(h * sum_ref[...] + sumsq_ref[...], 0.0)
        out = jnp.dot(h_act.astype(w2_ref.dtype), w2_ref[...],
                      preferred_element_type=jnp.float32)
        o_ref[...] = out.astype(o_ref.dtype)


# ---------------------------------------------------------------------------
# Wrapper
# ---------------------------------------------------------------------------
def mlp_forward(x, w1, w2, gamma, beta, *, tile_n=None, compute_dtype=None,
                force_tiled=False):
    """Forward of MLP(input_dim, hidden_dim, output_dim).

    x:     (N, D_in)
    w1:    (H, D_in)      PyTorch nn.Linear weight layout (out_features, in_features)
    w2:    (D_out, H)
    gamma: (H,), beta: (H,)   BatchNorm1d affine parameters
    compute_dtype: optional MXU operand dtype (e.g. jnp.bfloat16); accumulation
                   and BN math stay in float32.
    """
    n, d_in = x.shape
    h_dim = w1.shape[0]
    d_out = w2.shape[0]

    out_dtype = x.dtype
    mm_dtype = jnp.dtype(compute_dtype) if compute_dtype is not None else jnp.dtype(x.dtype)
    pack = _sublane_pack(mm_dtype)
    bpe = mm_dtype.itemsize
    out_bpe = jnp.dtype(out_dtype).itemsize

    d_in_p = _round_up(d_in, LANE)
    h_p = _round_up(h_dim, LANE)
    d_out_p = _round_up(d_out, LANE)

    vmem_budget = _vmem_budget_bytes()

    def _prep(n_pad):
        x_p = _pad_axis(_pad_axis(x, 0, n_pad), 1, d_in_p).astype(mm_dtype)
        w1_t = _pad_axis(_pad_axis(w1.T, 0, d_in_p), 1, h_p).astype(mm_dtype)
        w2_t = _pad_axis(_pad_axis(w2.T, 0, h_p), 1, d_out_p).astype(mm_dtype)
        gamma_p = _pad_axis(gamma.reshape(1, -1).astype(jnp.float32), 1, h_p)
        beta_p = _pad_axis(beta.reshape(1, -1).astype(jnp.float32), 1, h_p)
        return x_p, w1_t, w2_t, gamma_p, beta_p

    # Resident weights + BN params (bytes).
    w_bytes = (d_in_p * h_p + h_p * d_out_p) * bpe + 4 * h_p * 4

    # ---------------- fast path ----------------
    n_small = _round_up(n, pack)
    fast_bytes = (w_bytes
                  + n_small * d_in_p * bpe
                  + n_small * d_out_p * out_bpe
                  + 3 * n_small * h_p * 4)      # h, h_act, slack (f32)
    use_fast = (not force_tiled) and fast_bytes <= int(vmem_budget * 0.8)

    if use_fast:
        x_p, w1_t, w2_t, gamma_p, beta_p = _prep(n_small)
        kernel = functools.partial(_mlp_fused_kernel, n_true=n)
        out_p = pl.pallas_call(
            kernel,
            out_shape=jax.ShapeDtypeStruct((n_small, d_out_p), out_dtype),
            compiler_params=pltpu.CompilerParams(vmem_limit_bytes=vmem_budget),
            cost_estimate=pl.CostEstimate(
                flops=2 * n * (d_in * h_dim + h_dim * d_out),
                transcendentals=h_dim,
                bytes_accessed=int((n * d_in + h_dim * d_in + d_out * h_dim) * bpe
                                   + n * d_out * out_bpe)),
        )(x_p, w1_t, w2_t, gamma_p, beta_p)
        return out_p[:n, :d_out]

    # ---------------- tiled path ----------------
    if tile_n is None:
        # Prefer large tiles (fill the 256-wide MXU on v6e/v7x, amortize grid-step
        # overhead); shrink until the per-step working set fits the VMEM budget.
        tile_n = 512
        while tile_n > pack and (w_bytes
                                 + 2 * tile_n * (d_in_p * bpe + d_out_p * out_bpe)
                                 + 3 * tile_n * h_p * 4) > int(vmem_budget * 0.6):
            tile_n //= 2
    tile_n = max(pack, _round_up(min(tile_n, n), pack))
    n_p = _round_up(n, tile_n)
    n_tiles = n_p // tile_n

    # Decide whether the full h cache fits (avoids recomputing x@W1 and
    # re-streaming x); otherwise fall back to recompute.
    per_tile_bytes = (2 * tile_n * (d_in_p * bpe + d_out_p * out_bpe)
                      + 3 * tile_n * h_p * 4)
    cache_h = (w_bytes + per_tile_bytes + n_p * h_p * 4) <= int(vmem_budget * 0.8)
    h_cache_shape = (n_tiles, tile_n, h_p) if cache_h else (1, pack, LANE)

    x_p, w1_t, w2_t, gamma_p, beta_p = _prep(n_p)

    if cache_h:
        # Phase 1 does not need x: pin its block index to 0 so it is not
        # re-streamed from HBM a second time.
        x_index = lambda p, i: (i * (1 - p), 0)
    else:
        x_index = lambda p, i: (i, 0)

    def _const_spec(shape):
        # Constant-index operands: single-buffer them (double buffer = VMEM waste).
        return pl.BlockSpec(shape, lambda p, i: (0, 0), pipeline_mode=pl.Buffered(1))

    kernel = functools.partial(_mlp_tiled_kernel, n_true=n, cache_h=cache_h)

    gemm_flops = 2 * n_p * (d_in_p * h_p + h_p * d_out_p)
    out_p = pl.pallas_call(
        kernel,
        out_shape=jax.ShapeDtypeStruct((n_p, d_out_p), out_dtype),
        grid=(2, n_tiles),   # (phase, batch tile); phase 0 = stats, 1 = output
        in_specs=[
            pl.BlockSpec((tile_n, d_in_p), x_index),
            _const_spec((d_in_p, h_p)),       # W1 resident
            _const_spec((h_p, d_out_p)),      # W2 resident
            _const_spec((1, h_p)),            # gamma
            _const_spec((1, h_p)),            # beta
        ],
        # During phase 0 the output block index is pinned to 0 and never written,
        # so no uninitialized data is flushed; phase 1 fully writes tile i.
        out_specs=pl.BlockSpec((tile_n, d_out_p), lambda p, i: (i * p, 0)),
        scratch_shapes=[
            pltpu.VMEM(h_cache_shape, jnp.float32),   # cached h (phase 0 -> 1)
            pltpu.VMEM((1, h_p), jnp.float32),        # sum(h)   -> BN scale
            pltpu.VMEM((1, h_p), jnp.float32),        # sum(h*h) -> BN shift
        ],
        compiler_params=pltpu.CompilerParams(
            # Batch tiles accumulate into shared VMEM scratch -> sequential.
            dimension_semantics=("arbitrary", "arbitrary"),
            vmem_limit_bytes=vmem_budget),
        cost_estimate=pl.CostEstimate(
            flops=int(gemm_flops if cache_h else gemm_flops + 2 * n_p * d_in_p * h_p),
            transcendentals=h_p,
            bytes_accessed=int(x_p.size * bpe * (1 if cache_h else 2)
                               + (w1_t.size + w2_t.size) * bpe
                               + n_p * d_out_p * out_bpe)),
    )(x_p, w1_t, w2_t, gamma_p, beta_p)

    return out_p[:n, :d_out]


def reference_forward(x, w1, w2, gamma, beta):
    h = jnp.dot(x, w1.T, precision=jax.lax.Precision.HIGHEST)
    mean = jnp.mean(h, axis=0, keepdims=True)
    var = jnp.mean((h - mean) ** 2, axis=0, keepdims=True)
    h = (h - mean) * jax.lax.rsqrt(var + BN_EPS) * gamma[None, :] + beta[None, :]
    h = jnp.maximum(h, 0.0)
    return jnp.dot(h, w2.T, precision=jax.lax.Precision.HIGHEST)


if __name__ == "__main__":
    batch, input_dim, hidden_dim, output_dim = 200, 48, 96, 40

    key = jax.random.PRNGKey(0)
    kx, k1, k2, kg, kb = jax.random.split(key, 5)

    x = jax.random.normal(kx, (batch, input_dim), dtype=jnp.float32)
    # PyTorch nn.Linear weight layout: (out_features, in_features).
    w1 = jax.random.normal(k1, (hidden_dim, input_dim), dtype=jnp.float32) * 0.1
    w2 = jax.random.normal(k2, (output_dim, hidden_dim), dtype=jnp.float32) * 0.1
    gamma = 1.0 + 0.1 * jax.random.normal(kg, (hidden_dim,), dtype=jnp.float32)
    beta = 0.1 * jax.random.normal(kb, (hidden_dim,), dtype=jnp.float32)

    ref = reference_forward(x, w1, w2, gamma, beta)

    # 1) Fast path: whole problem resident in VMEM, single fused step.
    out_fast = jax.block_until_ready(mlp_forward(x, w1, w2, gamma, beta))
    assert out_fast.shape == (batch, output_dim)
    assert jnp.allclose(out_fast, ref, atol=1e-3, rtol=1e-3), float(
        jnp.max(jnp.abs(out_fast - ref)))

    # 2) Tiled path (forced): batch tiles + persistent VMEM h-cache + folded BN.
    batch2 = 600
    x2 = jax.random.normal(jax.random.PRNGKey(1), (batch2, input_dim),
                           dtype=jnp.float32)
    ref2 = reference_forward(x2, w1, w2, gamma, beta)
    out_tiled = jax.block_until_ready(
        mlp_forward(x2, w1, w2, gamma, beta, tile_n=256, force_tiled=True))
    assert out_tiled.shape == (batch2, output_dim)
    assert jnp.allclose(out_tiled, ref2, atol=1e-3, rtol=1e-3), float(
        jnp.max(jnp.abs(out_tiled - ref2)))

    print("KERNEL_OK")
</pallas_src>

<mosaic_0001>
module attributes {stable_mosaic.version = 11 : i64} {
  func.func @_mlp_fused_kernel(%arg0: memref<200x128xf32, #tpu.memory_space<vmem>>, %arg1: memref<128x128xf32, #tpu.memory_space<vmem>>, %arg2: memref<128x128xf32, #tpu.memory_space<vmem>>, %arg3: memref<1x128xf32, #tpu.memory_space<vmem>>, %arg4: memref<1x128xf32, #tpu.memory_space<vmem>>, %arg5: memref<200x128xf32, #tpu.memory_space<vmem>>) attributes {dimension_semantics = [], scalar_prefetch = 0 : i64, scratch_operands = 0 : i64, tpu.core_type = #tpu.core_type<tc>} {
    %c0 = arith.constant 0 : index
    %c0_0 = arith.constant 0 : index
    %0 = vector.load %arg0[%c0, %c0_0] : memref<200x128xf32, #tpu.memory_space<vmem>>, vector<200x128xf32>
    %c0_1 = arith.constant 0 : index
    %c0_2 = arith.constant 0 : index
    %1 = vector.load %arg1[%c0_1, %c0_2] : memref<128x128xf32, #tpu.memory_space<vmem>>, vector<128x128xf32>
    %cst = arith.constant dense<0.000000e+00> : vector<200x128xf32>
    %2 = tpu.matmul %0, %1, %cst {dimension_numbers = #tpu.dot_dimension_numbers<[1], [0], [0], [1], [0, 0, 1, 1], [], []>} : vector<200x128xf32>, vector<128x128xf32>, vector<200x128xf32> -> vector<200x128xf32>
    %cst_3 = arith.constant dense<0.000000e+00> : vector<128xf32>
    %3 = vector.multi_reduction <add>, %2, %cst_3 [0] : vector<200x128xf32> to vector<128xf32>
    %4 = vector.shape_cast %3 : vector<128xf32> to vector<1x128xf32>
    %cst_4 = arith.constant 5.000000e-03 : f32
    %5 = vector.broadcast %cst_4 : f32 to vector<1x128xf32>
    %6 = arith.mulf %4, %5 : vector<1x128xf32>
    %7 = tpu.iota {dimensions = array<i32: 0>} : vector<200x1xi32>
    %c200_i32 = arith.constant 200 : i32
    %8 = vector.broadcast %c200_i32 : i32 to vector<200x1xi32>
    %9 = arith.cmpi slt, %7, %8 : vector<200x1xi32>
    %10 = arith.extui %9 : vector<200x1xi1> to vector<200x1xi32>
    %11 = arith.sitofp %10 : vector<200x1xi32> to vector<200x1xf32>
    %12 = vector.broadcast %6 : vector<1x128xf32> to vector<200x128xf32>
    %13 = arith.subf %2, %12 : vector<200x128xf32>
    %14 = vector.broadcast %11 : vector<200x1xf32> to vector<200x128xf32>
    %15 = arith.mulf %13, %14 : vector<200x128xf32>
    %16 = arith.mulf %15, %15 : vector<200x128xf32>
    %cst_5 = arith.constant dense<0.000000e+00> : vector<128xf32>
    %17 = vector.multi_reduction <add>, %16, %cst_5 [0] : vector<200x128xf32> to vector<128xf32>
    %18 = vector.shape_cast %17 : vector<128xf32> to vector<1x128xf32>
    %cst_6 = arith.constant 5.000000e-03 : f32
    %19 = vector.broadcast %cst_6 : f32 to vector<1x128xf32>
    %20 = arith.mulf %18, %19 : vector<1x128xf32>
    %cst_7 = arith.constant 9.99999974E-6 : f32
    %21 = vector.broadcast %cst_7 : f32 to vector<1x128xf32>
    %22 = arith.addf %20, %21 : vector<1x128xf32>
    %23 = math.rsqrt %22 : vector<1x128xf32>
    %c0_8 = arith.constant 0 : index
    %c0_9 = arith.constant 0 : index
    %24 = vector.load %arg3[%c0_8, %c0_9] : memref<1x128xf32, #tpu.memory_space<vmem>>, vector<1x128xf32>
    %25 = arith.mulf %24, %23 : vector<1x128xf32>
    %c0_10 = arith.constant 0 : index
    %c0_11 = arith.constant 0 : index
    %26 = vector.load %arg4[%c0_10, %c0_11] : memref<1x128xf32, #tpu.memory_space<vmem>>, vector<1x128xf32>
    %27 = arith.mulf %6, %25 : vector<1x128xf32>
    %28 = arith.subf %26, %27 : vector<1x128xf32>
    %29 = vector.broadcast %25 : vector<1x128xf32> to vector<200x128xf32>
    %30 = arith.mulf %2, %29 : vector<200x128xf32>
    %31 = vector.broadcast %28 : vector<1x128xf32> to vector<200x128xf32>
    %32 = arith.addf %30, %31 : vector<200x128xf32>
    %cst_12 = arith.constant 0.000000e+00 : f32
    %33 = vector.broadcast %cst_12 : f32 to vector<200x128xf32>
    %34 = arith.maximumf %32, %33 : vector<200x128xf32>
    %c0_13 = arith.constant 0 : index
    %c0_14 = arith.constant 0 : index
    %35 = vector.load %arg2[%c0_13, %c0_14] : memref<128x128xf32, #tpu.memory_space<vmem>>, vector<128x128xf32>
    %cst_15 = arith.constant dense<0.000000e+00> : vector<200x128xf32>
    %36 = tpu.matmul %34, %35, %cst_15 {dimension_numbers = #tpu.dot_dimension_numbers<[1], [0], [0], [1], [0, 0, 1, 1], [], []>} : vector<200x128xf32>, vector<128x128xf32>, vector<200x128xf32> -> vector<200x128xf32>
    %c0_16 = arith.constant 0 : index
    %c0_17 = arith.constant 0 : index
    %37 = vector.load %arg5[%c0_16, %c0_17] : memref<200x128xf32, #tpu.memory_space<vmem>>, vector<200x128xf32>
    tpu.vector_store %arg5[%c0_16, %c0_17], %36 {strides = array<i32>} : memref<200x128xf32, #tpu.memory_space<vmem>>, vector<200x128xf32>,
    return
  }
}

</mosaic_0001>

<llo_original>
// kernel: tpu_custom_call.1
$region0: #{tpu_custom_call.1}
  #allocation0 [shape = 'u32[]', space=smem, size = 0x4, offset = 0x4, fixed_abs, tag = 'smem constant byte address 0x4 - core index']
  #allocation1 [shape = 'u32[144,128]{1,0:T(1,128)}', space=vmem, size = 0x12000, scoped, tag = 'internal scratch']
  %s0 = inlined_call_operand.hbm [shape: f32[200,128], index: 0, kind: input, shape index: {}]
  %s1 = inlined_call_operand.hbm [shape: f32[128,128], index: 1, kind: input, shape index: {}]
  %s2 = inlined_call_operand.hbm [shape: f32[128,128], index: 2, kind: input, shape index: {}]
  %s3 = inlined_call_operand.vmem [shape: f32[1,128], index: 3, kind: input, shape index: {}]
  %s4 = inlined_call_operand.vmem [shape: f32[1,128], index: 4, kind: input, shape index: {}]
  %s5 = inlined_call_operand.hbm [shape: f32[200,128], index: 5, kind: output, shape index: {}]
  %s6 = sld [smem:[#allocation0]]
  $region42: #{tpu_custom_call.1} parent=0
    _
  %s8 = ssub.s32 1, %s6
  %s9 = scalar_select 0, %s8, %s6
  $region1: #{tpu_custom_call.1} parent=0
    #allocation2 [shape = 'u8[102400]{0}', space=vmem, size = 0x19000, scoped, tag = 'input window, operand 0, single buffered']
    #allocation3 [shape = 's32[1]{0}', space=sflag, size = 0x4, scoped, tag = 'scoped memory for tpu_custom_call.1']
    #allocation4 [shape = 's32[1]{0}', space=sflag, size = 0x4, scoped, tag = 'scoped memory for tpu_custom_call.1']
    #allocation5 [shape = 'u8[65536]{0}', space=vmem, size = 0x10000, scoped, tag = 'input window, operand 1, single buffered']
    #allocation6 [shape = 's32[1]{0}', space=sflag, size = 0x4, scoped, tag = 'scoped memory for tpu_custom_call.1']
    #allocation7 [shape = 'u8[65536]{0}', space=vmem, size = 0x10000, scoped, tag = 'input window, operand 2, single buffered']
    #allocation8 [shape = 'u8[102400]{0}', space=vmem, size = 0x19000, scoped, tag = 'output window, operand 0, single buffered']
    %10 = vsyncpa [#allocation3], 0
    %11 = vsyncpa [#allocation6], 0
    %12 = vsyncpa [#allocation4], 0
    // Predicated region
    $region2: #{tpu_custom_call.1} parent=1 // pred_check
      _
    $region3: #{tpu_custom_call.1} parent=1 // pred_check_branch
      %14 = sbr.rel (0) target = $region5
    $region4: #{tpu_custom_call.1} parent=1 // pred_region
      %s16 = ssub.s32 3200, 3200
      %17 = vsyncadd [#allocation3], %s16
      %s18 = sshll.u32 [#allocation2], 4
      %s19 = int_to_ptr.vmem [resolvable:$true] %s18
      %24 = dma.hbm_to_vmem [thread:$0]  %s0, 3200, %s19, [#allocation3], 128, 128, 8
    $region5: #{tpu_custom_call.1} parent=1 // pred_fallthru
      _
    // Predicated region
    $region6: #{tpu_custom_call.1} parent=1 // pred_check
      _
    $region7: #{tpu_custom_call.1} parent=1 // pred_check_branch
      %26 = sbr.rel (0) target = $region9
    $region8: #{tpu_custom_call.1} parent=1 // pred_region
      %s28 = ssub.s32 2048, 2048
      %29 = vsyncadd [#allocation6], %s28
      %s30 = sshll.u32 [#allocation5], 4
      %s31 = int_to_ptr.vmem [resolvable:$true] %s30
      %36 = dma.hbm_to_vmem [thread:$0]  %s1, 2048, %s31, [#allocation6], 128, 128, 8
    $region9: #{tpu_custom_call.1} parent=1 // pred_fallthru
      _
    // Predicated region
    $region10: #{tpu_custom_call.1} parent=1 // pred_check
      _
    $region11: #{tpu_custom_call.1} parent=1 // pred_check_branch
      %38 = sbr.rel (0) target = $region13
    $region12: #{tpu_custom_call.1} parent=1 // pred_region
      %s40 = ssub.s32 2048, 2048
      %41 = vsyncadd [#allocation6], %s40
      %s42 = sshll.u32 [#allocation7], 4
      %s43 = int_to_ptr.vmem [resolvable:$true] %s42
      %48 = dma.hbm_to_vmem [thread:$0]  %s2, 2048, %s43, [#allocation6], 128, 128, 8
    $region13: #{tpu_custom_call.1} parent=1 // pred_fallthru
      _
    // Predicated region
    $region14: #{tpu_custom_call.1} parent=1 // pred_check
      _
    $region15: #{tpu_custom_call.1} parent=1 // pred_check_branch
      %50 = sbr.rel (0) target = $region17
    $region16: #{tpu_custom_call.1} parent=1 // pred_region
      _
    $region17: #{tpu_custom_call.1} parent=1 // pred_fallthru
      _
    // Predicated region
    $region18: #{tpu_custom_call.1} parent=1 // pred_check
      _
    $region19: #{tpu_custom_call.1} parent=1 // pred_check_branch
      %52 = sbr.rel (0) target = $region21
    $region20: #{tpu_custom_call.1} parent=1 // pred_region
      _
    $region21: #{tpu_custom_call.1} parent=1 // pred_fallthru
      _
    // Predicated region
    $region22: #{tpu_custom_call.1} parent=1 // pred_check
      _
    $region23: #{tpu_custom_call.1} parent=1 // pred_check_branch
      %54 = sbr.rel (0) target = $region25
    $region24: #{tpu_custom_call.1} parent=1 // pred_region
      %55 = dma.done [#allocation3], 3200
    $region25: #{tpu_custom_call.1} parent=1 // pred_fallthru
      _
    // Predicated region
    $region26: #{tpu_custom_call.1} parent=1 // pred_check
      _
    $region27: #{tpu_custom_call.1} parent=1 // pred_check_branch
      %57 = sbr.rel (0) target = $region29
    $region28: #{tpu_custom_call.1} parent=1 // pred_region
      %58 = dma.done [#allocation6], 2048
    $region29: #{tpu_custom_call.1} parent=1 // pred_fallthru
      _
    // Predicated region
    $region30: #{tpu_custom_call.1} parent=1 // pred_check
      _
    $region31: #{tpu_custom_call.1} parent=1 // pred_check_branch
      %60 = sbr.rel (0) target = $region33
    $region32: #{tpu_custom_call.1} parent=1 // pred_region
      %61 = dma.done [#allocation6], 2048
    $region33: #{tpu_custom_call.1} parent=1 // pred_fallthru
      _
    %v62 = vld [vmem:[#allocation2] sm:$0xff]
    %v63 = vld [vmem:[#allocation2 + $0x8] sm:$0xff]
    %v64 = vld [vmem:[#allocation2 + $0x10] sm:$0xff]
    %v65 = vld [vmem:[#allocation2 + $0x18] sm:$0xff]
    %v66 = vld [vmem:[#allocation2 + $0x20] sm:$0xff]
    %v67 = vld [vmem:[#allocation2 + $0x28] sm:$0xff]
    %v68 = vld [vmem:[#allocation2 + $0x30] sm:$0xff]
    %v69 = vld [vmem:[#allocation2 + $0x38] sm:$0xff]
    %v70 = vld [vmem:[#allocation2 + $0x40] sm:$0xff]
    %v71 = vld [vmem:[#allocation2 + $0x48] sm:$0xff]
    %v72 = vld [vmem:[#allocation2 + $0x50] sm:$0xff]
    %v73 = vld [vmem:[#allocation2 + $0x58] sm:$0xff]
    %v74 = vld [vmem:[#allocation2 + $0x60] sm:$0xff]
    %v75 = vld [vmem:[#allocation2 + $0x68] sm:$0xff]
    %v76 = vld [vmem:[#allocation2 + $0x70] sm:$0xff]
    %v77 = vld [vmem:[#allocation2 + $0x78] sm:$0xff]
    %v78 = vld [vmem:[#allocation2 + $0x80] sm:$0xff]
    %v79 = vld [vmem:[#allocation2 + $0x88] sm:$0xff]
    %v80 = vld [vmem:[#allocation2 + $0x90] sm:$0xff]
    %v81 = vld [vmem:[#allocation2 + $0x98] sm:$0xff]
    %v82 = vld [vmem:[#allocation2 + $0xa0] sm:$0xff]
    %v83 = vld [vmem:[#allocation2 + $0xa8] sm:$0xff]
    %v84 = vld [vmem:[#allocation2 + $0xb0] sm:$0xff]
    %v85 = vld [vmem:[#allocation2 + $0xb8] sm:$0xff]
    %v86 = vld [vmem:[#allocation2 + $0xc0] sm:$0xff]
    %v87 = vld [vmem:[#allocation5] sm:$0xff]
    %v88 = vld [vmem:[#allocation5 + $0x8] sm:$0xff]
    %v89 = vld [vmem:[#allocation5 + $0x10] sm:$0xff]
    %v90 = vld [vmem:[#allocation5 + $0x18] sm:$0xff]
    %v91 = vld [vmem:[#allocation5 + $0x20] sm:$0xff]
    %v92 = vld [vmem:[#allocation5 + $0x28] sm:$0xff]
    %v93 = vld [vmem:[#allocation5 + $0x30] sm:$0xff]
    %v94 = vld [vmem:[#allocation5 + $0x38] sm:$0xff]
    %v95 = vld [vmem:[#allocation5 + $0x40] sm:$0xff]
    %v96 = vld [vmem:[#allocation5 + $0x48] sm:$0xff]
    %v97 = vld [vmem:[#allocation5 + $0x50] sm:$0xff]
    %v98 = vld [vmem:[#allocation5 + $0x58] sm:$0xff]
    %v99 = vld [vmem:[#allocation5 + $0x60] sm:$0xff]
    %v100 = vld [vmem:[#allocation5 + $0x68] sm:$0xff]
    %v101 = vld [vmem:[#allocation5 + $0x70] sm:$0xff]
    %v102 = vld [vmem:[#allocation5 + $0x78] sm:$0xff]
    %103 = vmatprep.subr.mxu0 0.0
    %104 = vmatpush1.msra.mxu0 %v87
    %105 = vmatprep.subr.mxu0 0.0
    %106 = vmatpush1.msra.mxu0 %v88
    %107 = vmatprep.subr.mxu0 0.0
    %108 = vmatpush1.msra.mxu0 %v89
    %109 = vmatprep.subr.mxu0 0.0
    %110 = vmatpush1.msra.mxu0 %v90
    %111 = vmatprep.subr.mxu0 0.0
    %112 = vmatpush1.msra.mxu0 %v91
    %113 = vmatprep.subr.mxu0 0.0
    %114 = vmatpush1.msra.mxu0 %v92
    %115 = vmatprep.subr.mxu0 0.0
    %116 = vmatpush1.msra.mxu0 %v93
    %117 = vmatprep.subr.mxu0 0.0
    %118 = vmatpush1.msra.mxu0 %v94
    %119 = vmatprep.subr.mxu0 0.0
    %120 = vmatpush1.msra.mxu0 %v95
    %121 = vmatprep.subr.mxu0 0.0
    %122 = vmatpush1.msra.mxu0 %v96
    %123 = vmatprep.subr.mxu0 0.0
    %124 = vmatpush1.msra.mxu0 %v97
    %125 = vmatprep.subr.mxu0 0.0
    %126 = vmatpush1.msra.mxu0 %v98
    %127 = vmatprep.subr.mxu0 0.0
    %128 = vmatpush1.msra.mxu0 %v99
    %129 = vmatprep.subr.mxu0 0.0
    %130 = vmatpush1.msra.mxu0 %v100
    %131 = vmatprep.subr.mxu0 0.0
    %132 = vmatpush1.msra.mxu0 %v101
    %133 = vmatprep.subr.mxu0 0.0
    %134 = vmatpush1.msra.mxu0 %v102
    %135 = vmatprep.subr.mxu0 0.0
    %136 = vmatpush1.msra.mxu0 0.0
    %137 = vmatprep.subr.mxu0 0.0
    %138 = vmatpush1.msra.mxu0 0.0
    %139 = vmatprep.subr.mxu0 0.0
    %140 = vmatpush1.msra.mxu0 0.0
    %141 = vmatprep.subr.mxu0 0.0
    %142 = vmatpush1.msra.mxu0 0.0
    %143 = vmatprep.subr.mxu0 0.0
    %144 = vmatpush1.msra.mxu0 0.0
    %145 = vmatprep.subr.mxu0 0.0
    %146 = vmatpush1.msra.mxu0 0.0
    %147 = vmatprep.subr.mxu0 0.0
    %148 = vmatpush1.msra.mxu0 0.0
    %149 = vmatprep.subr.mxu0 0.0
    %150 = vmatpush1.msra.mxu0 0.0
    %151 = vmatprep.subr.mxu0 0.0
    %152 = vmatpush1.msra.mxu0 0.0
    %153 = vmatprep.subr.mxu0 0.0
    %154 = vmatpush1.msra.mxu0 0.0
    %155 = vmatprep.subr.mxu0 0.0
    %156 = vmatpush1.msra.mxu0 0.0
    %157 = vmatprep.subr.mxu0 0.0
    %158 = vmatpush1.msra.mxu0 0.0
    %159 = vmatprep.subr.mxu0 0.0
    %160 = vmatpush1.msra.mxu0 0.0
    %161 = vmatprep.subr.mxu0 0.0
    %162 = vmatpush1.msra.mxu0 0.0
    %163 = vmatprep.subr.mxu0 0.0
    %164 = vmatpush1.msra.mxu0 0.0
    %165 = vmatprep.subr.mxu0 0.0
    %166 = vmatpush1.msra.mxu0 0.0
    %167 = vmatprep.mubr.f32.mxu0 0.0
    %168 = vmatmul.mubr.f32.gmra.mrb[0].mxu0 %v62
    %v169 = vpop.f32.mrb[0].mxu0
    %v170 = vadd.f32 0.0, %v169
    %v171 = vpop.f32.mrb[0].mxu0
    %172 = vmatprep.mubr.f32.mxu0 0.0
    %173 = vmatmul.mubr.f32.gmra.mrb[0].mxu0 %v63
    %v174 = vpop.f32.mrb[0].mxu0
    %v175 = vadd.f32 0.0, %v174
    %v176 = vpop.f32.mrb[0].mxu0
    %177 = vmatprep.mubr.f32.mxu0 0.0
    %178 = vmatmul.mubr.f32.gmra.mrb[0].mxu0 %v64
    %v179 = vpop.f32.mrb[0].mxu0
    %v180 = vadd.f32 0.0, %v179
    %v181 = vpop.f32.mrb[0].mxu0
    %182 = vmatprep.mubr.f32.mxu0 0.0
    %183 = vmatmul.mubr.f32.gmra.mrb[0].mxu0 %v65
    %v184 = vpop.f32.mrb[0].mxu0
    %v185 = vadd.f32 0.0, %v184
    %v186 = vpop.f32.mrb[0].mxu0
    %187 = vmatprep.mubr.f32.mxu0 0.0
    %188 = vmatmul.mubr.f32.gmra.mrb[0].mxu0 %v66
    %v189 = vpop.f32.mrb[0].mxu0
    %v190 = vadd.f32 0.0, %v189
    %v191 = vpop.f32.mrb[0].mxu0
    %192 = vmatprep.mubr.f32.mxu0 0.0
    %193 = vmatmul.mubr.f32.gmra.mrb[0].mxu0 %v67
    %v194 = vpop.f32.mrb[0].mxu0
    %v195 = vadd.f32 0.0, %v194
    %v196 = vpop.f32.mrb[0].mxu0
    %197 = vmatprep.mubr.f32.mxu0 0.0
    %198 = vmatmul.mubr.f32.gmra.mrb[0].mxu0 %v68
    %v199 = vpop.f32.mrb[0].mxu0
    %v200 = vadd.f32 0.0, %v199
    %v201 = vpop.f32.mrb[0].mxu0
    %202 = vmatprep.mubr.f32.mxu0 0.0
    %203 = vmatmul.mubr.f32.gmra.mrb[0].mxu0 %v69
    %v204 = vpop.f32.mrb[0].mxu0
    %v205 = vadd.f32 0.0, %v204
    %v206 = vpop.f32.mrb[0].mxu0
    %207 = vmatprep.mubr.f32.mxu0 0.0
    %208 = vmatmul.mubr.f32.gmra.mrb[0].mxu0 %v70
    %v209 = vpop.f32.mrb[0].mxu0
    %v210 = vadd.f32 0.0, %v209
    %v211 = vpop.f32.mrb[0].mxu0
    %212 = vmatprep.mubr.f32.mxu0 0.0
    %213 = vmatmul.mubr.f32.gmra.mrb[0].mxu0 %v71
    %v214 = vpop.f32.mrb[0].mxu0
    %v215 = vadd.f32 0.0, %v214
    %v216 = vpop.f32.mrb[0].mxu0
    %217 = vmatprep.mubr.f32.mxu0 0.0
    %218 = vmatmul.mubr.f32.gmra.mrb[0].mxu0 %v72
    %v219 = vpop.f32.mrb[0].mxu0
    %v220 = vadd.f32 0.0, %v219
    %v221 = vpop.f32.mrb[0].mxu0
    %222 = vmatprep.mubr.f32.mxu0 0.0
    %223 = vmatmul.mubr.f32.gmra.mrb[0].mxu0 %v73
    %v224 = vpop.f32.mrb[0].mxu0
    %v225 = vadd.f32 0.0, %v224
    %v226 = vpop.f32.mrb[0].mxu0
    %227 = vmatprep.mubr.f32.mxu0 0.0
    %228 = vmatmul.mubr.f32.gmra.mrb[0].mxu0 %v74
    %v229 = vpop.f32.mrb[0].mxu0
    %v230 = vadd.f32 0.0, %v229
    %v231 = vpop.f32.mrb[0].mxu0
    %232 = vmatprep.mubr.f32.mxu0 0.0
    %233 = vmatmul.mubr.f32.gmra.mrb[0].mxu0 %v75
    %v234 = vpop.f32.mrb[0].mxu0
    %v235 = vadd.f32 0.0, %v234
    %v236 = vpop.f32.mrb[0].mxu0
    %237 = vmatprep.mubr.f32.mxu0 0.0
    %238 = vmatmul.mubr.f32.gmra.mrb[0].mxu0 %v76
    %v239 = vpop.f32.mrb[0].mxu0
    %v240 = vadd.f32 0.0, %v239
    %v241 = vpop.f32.mrb[0].mxu0
    %242 = vmatprep.mubr.f32.mxu0 0.0
    %243 = vmatmul.mubr.f32.gmra.mrb[0].mxu0 %v77
    %v244 = vpop.f32.mrb[0].mxu0
    %v245 = vadd.f32 0.0, %v244
    %v246 = vpop.f32.mrb[0].mxu0
    %247 = vmatprep.mubr.f32.mxu0 0.0
    %248 = vmatmul.mubr.f32.gmra.mrb[0].mxu0 %v78
    %v249 = vpop.f32.mrb[0].mxu0
    %v250 = vadd.f32 0.0, %v249
    %v251 = vpop.f32.mrb[0].mxu0
    %252 = vmatprep.mubr.f32.mxu0 0.0
    %253 = vmatmul.mubr.f32.gmra.mrb[0].mxu0 %v79
    %v254 = vpop.f32.mrb[0].mxu0
    %v255 = vadd.f32 0.0, %v254
    %v256 = vpop.f32.mrb[0].mxu0
    %257 = vmatprep.mubr.f32.mxu0 0.0
    %258 = vmatmul.mubr.f32.gmra.mrb[0].mxu0 %v80
    %v259 = vpop.f32.mrb[0].mxu0
    %v260 = vadd.f32 0.0, %v259
    %v261 = vpop.f32.mrb[0].mxu0
    %262 = vmatprep.mubr.f32.mxu0 0.0
    %263 = vmatmul.mubr.f32.gmra.mrb[0].mxu0 %v81
    %v264 = vpop.f32.mrb[0].mxu0
    %v265 = vadd.f32 0.0, %v264
    %v266 = vpop.f32.mrb[0].mxu0
    %267 = vmatprep.mubr.f32.mxu0 0.0
    %268 = vmatmul.mubr.f32.gmra.mrb[0].mxu0 %v82
    %v269 = vpop.f32.mrb[0].mxu0
    %v270 = vadd.f32 0.0, %v269
    %v271 = vpop.f32.mrb[0].mxu0
    %272 = vmatprep.mubr.f32.mxu0 0.0
    %273 = vmatmul.mubr.f32.gmra.mrb[0].mxu0 %v83
    %v274 = vpop.f32.mrb[0].mxu0
    %v275 = vadd.f32 0.0, %v274
    %v276 = vpop.f32.mrb[0].mxu0
    %277 = vmatprep.mubr.f32.mxu0 0.0
    %278 = vmatmul.mubr.f32.gmra.mrb[0].mxu0 %v84
    %v279 = vpop.f32.mrb[0].mxu0
    %v280 = vadd.f32 0.0, %v279
    %v281 = vpop.f32.mrb[0].mxu0
    %282 = vmatprep.mubr.f32.mxu0 0.0
    %283 = vmatmul.mubr.f32.gmra.mrb[0].mxu0 %v85
    %v284 = vpop.f32.mrb[0].mxu0
    %v285 = vadd.f32 0.0, %v284
    %v286 = vpop.f32.mrb[0].mxu0
    %287 = vmatprep.mubr.f32.mxu0 0.0
    %288 = vmatmul.mubr.f32.gmra.mrb[0].mxu0 %v86
    %v289 = vpop.f32.mrb[0].mxu0
    %v290 = vadd.f32 0.0, %v289
    %v291 = vpop.f32.mrb[0].mxu0
    %292 = vdwg.mxu0
    %v293 = vadd.f32 %v170, %v175
    %v294 = vadd.f32 %v293, %v180
    %v295 = vadd.f32 %v294, %v185
    %v296 = vadd.f32 %v295, %v190
    %v297 = vadd.f32 %v296, %v195
    %v298 = vadd.f32 %v297, %v200
    %v299 = vadd.f32 %v298, %v205
    %v300 = vadd.f32 %v299, %v210
    %v301 = vadd.f32 %v300, %v215
    %v302 = vadd.f32 %v301, %v220
    %v303 = vadd.f32 %v302, %v225
    %v304 = vadd.f32 %v303, %v230
    %v305 = vadd.f32 %v304, %v235
    %v306 = vadd.f32 %v305, %v240
    %v307 = vadd.f32 %v306, %v245
    %v308 = vadd.f32 %v307, %v250
    %v309 = vadd.f32 %v308, %v255
    %v310 = vadd.f32 %v309, %v260
    %v311 = vadd.f32 %v310, %v265
    %v312 = vadd.f32 %v311, %v270
    %v313 = vadd.f32 %v312, %v275
    %v314 = vadd.f32 %v313, %v280
    %v315 = vadd.f32 %v314, %v285
    %v316 = vadd.f32 %v315, %v290
    %v317 = vrot.slane %v316, 4
    %v318 = vadd.f32 %v316, %v317
    %v319 = vrot.slane %v318, 2
    %v320 = vadd.f32 %v318, %v319
    %v321 = vrot.slane %v320, 1
    %v322 = vadd.f32 %v320, %v321
    %v323 = vmul.f32 %v322, 0.005
    %v324 = vlaneseq
    %v325 = vshrl.u32 %v324, 7
    %v326 = vadd.s32 %v325, 8
    %v327 = vadd.s32 %v325, 16
    %v328 = vadd.s32 %v325, 24
    %v329 = vadd.s32 %v325, 32
    %v330 = vadd.s32 %v325, 40
    %v331 = vadd.s32 %v325, 48
    %v332 = vadd.s32 %v325, 56
    %v333 = vadd.s32 %v325, 64
    %v334 = vadd.s32 %v325, 72
    %v335 = vadd.s32 %v325, 80
    %v336 = vadd.s32 %v325, 88
    %v337 = vadd.s32 %v325, 96
    %v338 = vadd.s32 %v325, 104
    %v339 = vadd.s32 %v325, 112
    %v340 = vadd.s32 %v325, 120
    %v341 = vadd.s32 %v325, 128
    %v342 = vadd.s32 %v325, 136
    %v343 = vadd.s32 %v325, 144
    %v344 = vadd.s32 %v325, 152
    %v345 = vadd.s32 %v325, 160
    %v346 = vadd.s32 %v325, 168
    %v347 = vadd.s32 %v325, 176
    %v348 = vadd.s32 %v325, 184
    %v349 = vadd.s32 %v325, 192
    %vm350 = vcmp.lt.s32.totalorder %v325, 200
    %vm351 = vcmp.lt.s32.totalorder %v326, 200
    %vm352 = vcmp.lt.s32.totalorder %v327, 200
    %vm353 = vcmp.lt.s32.totalorder %v328, 200
    %vm354 = vcmp.lt.s32.totalorder %v329, 200
    %vm355 = vcmp.lt.s32.totalorder %v330, 200
    %vm356 = vcmp.lt.s32.totalorder %v331, 200
    %vm357 = vcmp.lt.s32.totalorder %v332, 200
    %vm358 = vcmp.lt.s32.totalorder %v333, 200
    %vm359 = vcmp.lt.s32.totalorder %v334, 200
    %vm360 = vcmp.lt.s32.totalorder %v335, 200
    %vm361 = vcmp.lt.s32.totalorder %v336, 200
    %vm362 = vcmp.lt.s32.totalorder %v337, 200
    %vm363 = vcmp.lt.s32.totalorder %v338, 200
    %vm364 = vcmp.lt.s32.totalorder %v339, 200
    %vm365 = vcmp.lt.s32.totalorder %v340, 200
    %vm366 = vcmp.lt.s32.totalorder %v341, 200
    %vm367 = vcmp.lt.s32.totalorder %v342, 200
    %vm368 = vcmp.lt.s32.totalorder %v343, 200
    %vm369 = vcmp.lt.s32.totalorder %v344, 200
    %vm370 = vcmp.lt.s32.totalorder %v345, 200
    %vm371 = vcmp.lt.s32.totalorder %v346, 200
    %vm372 = vcmp.lt.s32.totalorder %v347, 200
    %vm373 = vcmp.lt.s32.totalorder %v348, 200
    %vm374 = vcmp.lt.s32.totalorder %v349, 200
    %v375 = vsel %vm350, 1, 0
    %v376 = vsel %vm351, 1, 0
    %v377 = vsel %vm352, 1, 0
    %v378 = vsel %vm353, 1, 0
    %v379 = vsel %vm354, 1, 0
    %v380 = vsel %vm355, 1, 0
    %v381 = vsel %vm356, 1, 0
    %v382 = vsel %vm357, 1, 0
    %v383 = vsel %vm358, 1, 0
    %v384 = vsel %vm359, 1, 0
    %v385 = vsel %vm360, 1, 0
    %v386 = vsel %vm361, 1, 0
    %v387 = vsel %vm362, 1, 0
    %v388 = vsel %vm363, 1, 0
    %v389 = vsel %vm364, 1, 0
    %v390 = vsel %vm365, 1, 0
    %v391 = vsel %vm366, 1, 0
    %v392 = vsel %vm367, 1, 0
    %v393 = vsel %vm368, 1, 0
    %v394 = vsel %vm369, 1, 0
    %v395 = vsel %vm370, 1, 0
    %v396 = vsel %vm371, 1, 0
    %v397 = vsel %vm372, 1, 0
    %v398 = vsel %vm373, 1, 0
    %v399 = vsel %vm374, 1, 0
    %v400 = vcvt.s32.f32 %v375
    %v401 = vcvt.s32.f32 %v376
    %v402 = vcvt.s32.f32 %v377
    %v403 = vcvt.s32.f32 %v378
    %v404 = vcvt.s32.f32 %v379
    %v405 = vcvt.s32.f32 %v380
    %v406 = vcvt.s32.f32 %v381
    %v407 = vcvt.s32.f32 %v382
    %v408 = vcvt.s32.f32 %v383
    %v409 = vcvt.s32.f32 %v384
    %v410 = vcvt.s32.f32 %v385
    %v411 = vcvt.s32.f32 %v386
    %v412 = vcvt.s32.f32 %v387
    %v413 = vcvt.s32.f32 %v388
    %v414 = vcvt.s32.f32 %v389
    %v415 = vcvt.s32.f32 %v390
    %v416 = vcvt.s32.f32 %v391
    %v417 = vcvt.s32.f32 %v392
    %v418 = vcvt.s32.f32 %v393
    %v419 = vcvt.s32.f32 %v394
    %v420 = vcvt.s32.f32 %v395
    %v421 = vcvt.s32.f32 %v396
    %v422 = vcvt.s32.f32 %v397
    %v423 = vcvt.s32.f32 %v398
    %v424 = vcvt.s32.f32 %v399
    %v425 = vsub.f32 %v170, %v323
    %v426 = vsub.f32 %v175, %v323
    %v427 = vsub.f32 %v180, %v323
    %v428 = vsub.f32 %v185, %v323
    %v429 = vsub.f32 %v190, %v323
    %v430 = vsub.f32 %v195, %v323
    %v431 = vsub.f32 %v200, %v323
    %v432 = vsub.f32 %v205, %v323
    %v433 = vsub.f32 %v210, %v323
    %v434 = vsub.f32 %v215, %v323
    %v435 = vsub.f32 %v220, %v323
    %v436 = vsub.f32 %v225, %v323
    %v437 = vsub.f32 %v230, %v323
    %v438 = vsub.f32 %v235, %v323
    %v439 = vsub.f32 %v240, %v323
    %v440 = vsub.f32 %v245, %v323
    %v441 = vsub.f32 %v250, %v323
    %v442 = vsub.f32 %v255, %v323
    %v443 = vsub.f32 %v260, %v323
    %v444 = vsub.f32 %v265, %v323
    %v445 = vsub.f32 %v270, %v323
    %v446 = vsub.f32 %v275, %v323
    %v447 = vsub.f32 %v280, %v323
    %v448 = vsub.f32 %v285, %v323
    %v449 = vsub.f32 %v290, %v323
    %v450 = vmul.f32 %v425, %v400
    %v451 = vmul.f32 %v426, %v401
    %v452 = vmul.f32 %v427, %v402
    %v453 = vmul.f32 %v428, %v403
    %v454 = vmul.f32 %v429, %v404
    %v455 = vmul.f32 %v430, %v405
    %v456 = vmul.f32 %v431, %v406
    %v457 = vmul.f32 %v432, %v407
    %v458 = vmul.f32 %v433, %v408
    %v459 = vmul.f32 %v434, %v409
    %v460 = vmul.f32 %v435, %v410
    %v461 = vmul.f32 %v436, %v411
    %v462 = vmul.f32 %v437, %v412
    %v463 = vmul.f32 %v438, %v413
    %v464 = vmul.f32 %v439, %v414
    %v465 = vmul.f32 %v440, %v415
    %v466 = vmul.f32 %v441, %v416
    %v467 = vmul.f32 %v442, %v417
    %v468 = vmul.f32 %v443, %v418
    %v469 = vmul.f32 %v444, %v419
    %v470 = vmul.f32 %v445, %v420
    %v471 = vmul.f32 %v446, %v421
    %v472 = vmul.f32 %v447, %v422
    %v473 = vmul.f32 %v448, %v423
    %v474 = vmul.f32 %v449, %v424
    %v475 = vmul.f32 %v450, %v450
    %v476 = vmul.f32 %v451, %v451
    %v477 = vmul.f32 %v452, %v452
    %v478 = vmul.f32 %v453, %v453
    %v479 = vmul.f32 %v454, %v454
    %v480 = vmul.f32 %v455, %v455
    %v481 = vmul.f32 %v456, %v456
    %v482 = vmul.f32 %v457, %v457
    %v483 = vmul.f32 %v458, %v458
    %v484 = vmul.f32 %v459, %v459
    %v485 = vmul.f32 %v460, %v460
    %v486 = vmul.f32 %v461, %v461
    %v487 = vmul.f32 %v462, %v462
    %v488 = vmul.f32 %v463, %v463
    %v489 = vmul.f32 %v464, %v464
    %v490 = vmul.f32 %v465, %v465
    %v491 = vmul.f32 %v466, %v466
    %v492 = vmul.f32 %v467, %v467
    %v493 = vmul.f32 %v468, %v468
    %v494 = vmul.f32 %v469, %v469
    %v495 = vmul.f32 %v470, %v470
    %v496 = vmul.f32 %v471, %v471
    %v497 = vmul.f32 %v472, %v472
    %v498 = vmul.f32 %v473, %v473
    %v499 = vmul.f32 %v474, %v474
    %v500 = vadd.f32 %v475, %v476
    %v501 = vadd.f32 %v500, %v477
    %v502 = vadd.f32 %v501, %v478
    %v503 = vadd.f32 %v502, %v479
    %v504 = vadd.f32 %v503, %v480
    %v505 = vadd.f32 %v504, %v481
    %v506 = vadd.f32 %v505, %v482
    %v507 = vadd.f32 %v506, %v483
    %v508 = vadd.f32 %v507, %v484
    %v509 = vadd.f32 %v508, %v485
    %v510 = vadd.f32 %v509, %v486
    %v511 = vadd.f32 %v510, %v487
    %v512 = vadd.f32 %v511, %v488
    %v513 = vadd.f32 %v512, %v489
    %v514 = vadd.f32 %v513, %v490
    %v515 = vadd.f32 %v514, %v491
    %v516 = vadd.f32 %v515, %v492
    %v517 = vadd.f32 %v516, %v493
    %v518 = vadd.f32 %v517, %v494
    %v519 = vadd.f32 %v518, %v495
    %v520 = vadd.f32 %v519, %v496
    %v521 = vadd.f32 %v520, %v497
    %v522 = vadd.f32 %v521, %v498
    %v523 = vadd.f32 %v522, %v499
    %v524 = vrot.slane %v523, 4
    %v525 = vadd.f32 %v523, %v524
    %v526 = vrot.slane %v525, 2
    %v527 = vadd.f32 %v525, %v526
    %v528 = vrot.slane %v527, 1
    %v529 = vadd.f32 %v527, %v528
    %v530 = vmul.f32 %v529, 0.005
    %v531 = vadd.f32 %v530, 1e-05
    %v532 = vrsqrt.pop %v531
    %v533 = vld [vmem:[%s3] sm:$0x1]
    %v534 = vmul.f32 %v533, %v532
    %v535 = vld [vmem:[%s4] sm:$0x1]
    %v536 = vmul.f32 %v323, %v534
    %v537 = vsub.f32 %v535, %v536
    %v539 = vlaneseq
    %v540 = vshrl.u32 %v539, 7
    %v541 = vsub.s32 0, %v540
    %v542 = vrot.slane %v534, %v541
    %v544 = vmul.f32 %v170, %v542
    %v545 = vmul.f32 %v175, %v542
    %v546 = vmul.f32 %v180, %v542
    %v547 = vmul.f32 %v185, %v542
    %v548 = vmul.f32 %v190, %v542
    %v549 = vmul.f32 %v195, %v542
    %v550 = vmul.f32 %v200, %v542
    %v551 = vmul.f32 %v205, %v542
    %v552 = vmul.f32 %v210, %v542
    %v553 = vmul.f32 %v215, %v542
    %v554 = vmul.f32 %v220, %v542
    %v555 = vmul.f32 %v225, %v542
    %v556 = vmul.f32 %v230, %v542
    %v557 = vmul.f32 %v235, %v542
    %v558 = vmul.f32 %v240, %v542
    %v559 = vmul.f32 %v245, %v542
    %v560 = vmul.f32 %v250, %v542
    %v561 = vmul.f32 %v255, %v542
    %v562 = vmul.f32 %v260, %v542
    %v563 = vmul.f32 %v265, %v542
    %v564 = vmul.f32 %v270, %v542
    %v565 = vmul.f32 %v275, %v542
    %v566 = vmul.f32 %v280, %v542
    %v567 = vmul.f32 %v285, %v542
    %v568 = vmul.f32 %v290, %v542
    %v570 = vlaneseq
    %v571 = vshrl.u32 %v570, 7
    %v572 = vsub.s32 0, %v571
    %v573 = vrot.slane %v537, %v572
    %v575 = vadd.f32 %v544, %v573
    %v576 = vadd.f32 %v545, %v573
    %v577 = vadd.f32 %v546, %v573
    %v578 = vadd.f32 %v547, %v573
    %v579 = vadd.f32 %v548, %v573
    %v580 = vadd.f32 %v549, %v573
    %v581 = vadd.f32 %v550, %v573
    %v582 = vadd.f32 %v551, %v573
    %v583 = vadd.f32 %v552, %v573
    %v584 = vadd.f32 %v553, %v573
    %v585 = vadd.f32 %v554, %v573
    %v586 = vadd.f32 %v555, %v573
    %v587 = vadd.f32 %v556, %v573
    %v588 = vadd.f32 %v557, %v573
    %v589 = vadd.f32 %v558, %v573
    %v590 = vadd.f32 %v559, %v573
    %v591 = vadd.f32 %v560, %v573
    %v592 = vadd.f32 %v561, %v573
    %v593 = vadd.f32 %v562, %v573
    %v594 = vadd.f32 %v563, %v573
    %v595 = vadd.f32 %v564, %v573
    %v596 = vadd.f32 %v565, %v573
    %v597 = vadd.f32 %v566, %v573
    %v598 = vadd.f32 %v567, %v573
    %v599 = vadd.f32 %v568, %v573
    %v600 = vmax.f32 %v575, 0.0
    %v601 = vmax.f32 %v576, 0.0
    %v602 = vmax.f32 %v577, 0.0
    %v603 = vmax.f32 %v578, 0.0
    %v604 = vmax.f32 %v579, 0.0
    %v605 = vmax.f32 %v580, 0.0
    %v606 = vmax.f32 %v581, 0.0
    %v607 = vmax.f32 %v582, 0.0
    %v608 = vmax.f32 %v583, 0.0
    %v609 = vmax.f32 %v584, 0.0
    %v610 = vmax.f32 %v585, 0.0
    %v611 = vmax.f32 %v586, 0.0
    %v612 = vmax.f32 %v587, 0.0
    %v613 = vmax.f32 %v588, 0.0
    %v614 = vmax.f32 %v589, 0.0
    %v615 = vmax.f32 %v590, 0.0
    %v616 = vmax.f32 %v591, 0.0
    %v617 = vmax.f32 %v592, 0.0
    %v618 = vmax.f32 %v593, 0.0
    %v619 = vmax.f32 %v594, 0.0
    %v620 = vmax.f32 %v595, 0.0
    %v621 = vmax.f32 %v596, 0.0
    %v622 = vmax.f32 %v597, 0.0
    %v623 = vmax.f32 %v598, 0.0
    %v624 = vmax.f32 %v599, 0.0
    %v625 = vld [vmem:[#allocation7] sm:$0xff]
    %v626 = vld [vmem:[#allocation7 + $0x8] sm:$0xff]
    %v627 = vld [vmem:[#allocation7 + $0x10] sm:$0xff]
    %v628 = vld [vmem:[#allocation7 + $0x18] sm:$0xff]
    %v629 = vld [vmem:[#allocation7 + $0x20] sm:$0xff]
    %v630 = vld [vmem:[#allocation7 + $0x28] sm:$0xff]
    %v631 = vld [vmem:[#allocation7 + $0x30] sm:$0xff]
    %v632 = vld [vmem:[#allocation7 + $0x38] sm:$0xff]
    %v633 = vld [vmem:[#allocation7 + $0x40] sm:$0xff]
    %v634 = vld [vmem:[#allocation7 + $0x48] sm:$0xff]
    %v635 = vld [vmem:[#allocation7 + $0x50] sm:$0xff]
    %v636 = vld [vmem:[#allocation7 + $0x58] sm:$0xff]
    %v637 = vld [vmem:[#allocation7 + $0x60] sm:$0xff]
    %v638 = vld [vmem:[#allocation7 + $0x68] sm:$0xff]
    %v639 = vld [vmem:[#allocation7 + $0x70] sm:$0xff]
    %v640 = vld [vmem:[#allocation7 + $0x78] sm:$0xff]
    %641 = vmatprep.subr.mxu0 0.0
    %642 = vmatpush1.msra.mxu0 %v625
    %643 = vmatprep.subr.mxu0 0.0
    %644 = vmatpush1.msra.mxu0 %v626
    %645 = vmatprep.subr.mxu0 0.0
    %646 = vmatpush1.msra.mxu0 %v627
    %647 = vmatprep.subr.mxu0 0.0
    %648 = vmatpush1.msra.mxu0 %v628
    %649 = vmatprep.subr.mxu0 0.0
    %650 = vmatpush1.msra.mxu0 %v629
    %651 = vmatprep.subr.mxu0 0.0
    %652 = vmatpush1.msra.mxu0 %v630
    %653 = vmatprep.subr.mxu0 0.0
    %654 = vmatpush1.msra.mxu0 %v631
    %655 = vmatprep.subr.mxu0 0.0
    %656 = vmatpush1.msra.mxu0 %v632
    %657 = vmatprep.subr.mxu0 0.0
    %658 = vmatpush1.msra.mxu0 %v633
    %659 = vmatprep.subr.mxu0 0.0
    %660 = vmatpush1.msra.mxu0 %v634
    %661 = vmatprep.subr.mxu0 0.0
    %662 = vmatpush1.msra.mxu0 %v635
    %663 = vmatprep.subr.mxu0 0.0
    %664 = vmatpush1.msra.mxu0 %v636
    %665 = vmatprep.subr.mxu0 0.0
    %666 = vmatpush1.msra.mxu0 %v637
    %667 = vmatprep.subr.mxu0 0.0
    %668 = vmatpush1.msra.mxu0 %v638
    %669 = vmatprep.subr.mxu0 0.0
    %670 = vmatpush1.msra.mxu0 %v639
    %671 = vmatprep.subr.mxu0 0.0
    %672 = vmatpush1.msra.mxu0 %v640
    %673 = vmatprep.subr.mxu0 0.0
    %674 = vmatpush1.msra.mxu0 0.0
    %675 = vmatprep.subr.mxu0 0.0
    %676 = vmatpush1.msra.mxu0 0.0
    %677 = vmatprep.subr.mxu0 0.0
    %678 = vmatpush1.msra.mxu0 0.0
    %679 = vmatprep.subr.mxu0 0.0
    %680 = vmatpush1.msra.mxu0 0.0
    %681 = vmatprep.subr.mxu0 0.0
    %682 = vmatpush1.msra.mxu0 0.0
    %683 = vmatprep.subr.mxu0 0.0
    %684 = vmatpush1.msra.mxu0 0.0
    %685 = vmatprep.subr.mxu0 0.0
    %686 = vmatpush1.msra.mxu0 0.0
    %687 = vmatprep.subr.mxu0 0.0
    %688 = vmatpush1.msra.mxu0 0.0
    %689 = vmatprep.subr.mxu0 0.0
    %690 = vmatpush1.msra.mxu0 0.0
    %691 = vmatprep.subr.mxu0 0.0
    %692 = vmatpush1.msra.mxu0 0.0
    %693 = vmatprep.subr.mxu0 0.0
    %694 = vmatpush1.msra.mxu0 0.0
    %695 = vmatprep.subr.mxu0 0.0
    %696 = vmatpush1.msra.mxu0 0.0
    %697 = vmatprep.subr.mxu0 0.0
    %698 = vmatpush1.msra.mxu0 0.0
    %699 = vmatprep.subr.mxu0 0.0
    %700 = vmatpush1.msra.mxu0 0.0
    %701 = vmatprep.subr.mxu0 0.0
    %702 = vmatpush1.msra.mxu0 0.0
    %703 = vmatprep.subr.mxu0 0.0
    %704 = vmatpush1.msra.mxu0 0.0
    %705 = vmatprep.mubr.f32.mxu0 0.0
    %706 = vmatmul.mubr.f32.gmra.mrb[0].mxu0 %v600
    %v707 = vpop.f32.mrb[0].mxu0
    %v708 = vadd.f32 0.0, %v707
    %v709 = vpop.f32.mrb[0].mxu0
    %710 = vmatprep.mubr.f32.mxu0 0.0
    %711 = vmatmul.mubr.f32.gmra.mrb[0].mxu0 %v601
    %v712 = vpop.f32.mrb[0].mxu0
    %v713 = vadd.f32 0.0, %v712
    %v714 = vpop.f32.mrb[0].mxu0
    %715 = vmatprep.mubr.f32.mxu0 0.0
    %716 = vmatmul.mubr.f32.gmra.mrb[0].mxu0 %v602
    %v717 = vpop.f32.mrb[0].mxu0
    %v718 = vadd.f32 0.0, %v717
    %v719 = vpop.f32.mrb[0].mxu0
    %720 = vmatprep.mubr.f32.mxu0 0.0
    %721 = vmatmul.mubr.f32.gmra.mrb[0].mxu0 %v603
    %v722 = vpop.f32.mrb[0].mxu0
    %v723 = vadd.f32 0.0, %v722
    %v724 = vpop.f32.mrb[0].mxu0
    %725 = vmatprep.mubr.f32.mxu0 0.0
    %726 = vmatmul.mubr.f32.gmra.mrb[0].mxu0 %v604
    %v727 = vpop.f32.mrb[0].mxu0
    %v728 = vadd.f32 0.0, %v727
    %v729 = vpop.f32.mrb[0].mxu0
    %730 = vmatprep.mubr.f32.mxu0 0.0
    %731 = vmatmul.mubr.f32.gmra.mrb[0].mxu0 %v605
    %v732 = vpop.f32.mrb[0].mxu0
    %v733 = vadd.f32 0.0, %v732
    %v734 = vpop.f32.mrb[0].mxu0
    %735 = vmatprep.mubr.f32.mxu0 0.0
    %736 = vmatmul.mubr.f32.gmra.mrb[0].mxu0 %v606
    %v737 = vpop.f32.mrb[0].mxu0
    %v738 = vadd.f32 0.0, %v737
    %v739 = vpop.f32.mrb[0].mxu0
    %740 = vmatprep.mubr.f32.mxu0 0.0
    %741 = vmatmul.mubr.f32.gmra.mrb[0].mxu0 %v607
    %v742 = vpop.f32.mrb[0].mxu0
    %v743 = vadd.f32 0.0, %v742
    %v744 = vpop.f32.mrb[0].mxu0
    %745 = vmatprep.mubr.f32.mxu0 0.0
    %746 = vmatmul.mubr.f32.gmra.mrb[0].mxu0 %v608
    %v747 = vpop.f32.mrb[0].mxu0
    %v748 = vadd.f32 0.0, %v747
    %v749 = vpop.f32.mrb[0].mxu0
    %750 = vmatprep.mubr.f32.mxu0 0.0
    %751 = vmatmul.mubr.f32.gmra.mrb[0].mxu0 %v609
    %v752 = vpop.f32.mrb[0].mxu0
    %v753 = vadd.f32 0.0, %v752
    %v754 = vpop.f32.mrb[0].mxu0
    %755 = vmatprep.mubr.f32.mxu0 0.0
    %756 = vmatmul.mubr.f32.gmra.mrb[0].mxu0 %v610
    %v757 = vpop.f32.mrb[0].mxu0
    %v758 = vadd.f32 0.0, %v757
    %v759 = vpop.f32.mrb[0].mxu0
    %760 = vmatprep.mubr.f32.mxu0 0.0
    %761 = vmatmul.mubr.f32.gmra.mrb[0].mxu0 %v611
    %v762 = vpop.f32.mrb[0].mxu0
    %v763 = vadd.f32 0.0, %v762
    %v764 = vpop.f32.mrb[0].mxu0
    %765 = vmatprep.mubr.f32.mxu0 0.0
    %766 = vmatmul.mubr.f32.gmra.mrb[0].mxu0 %v612
    %v767 = vpop.f32.mrb[0].mxu0
    %v768 = vadd.f32 0.0, %v767
    %v769 = vpop.f32.mrb[0].mxu0
    %770 = vmatprep.mubr.f32.mxu0 0.0
    %771 = vmatmul.mubr.f32.gmra.mrb[0].mxu0 %v613
    %v772 = vpop.f32.mrb[0].mxu0
    %v773 = vadd.f32 0.0, %v772
    %v774 = vpop.f32.mrb[0].mxu0
    %775 = vmatprep.mubr.f32.mxu0 0.0
    %776 = vmatmul.mubr.f32.gmra.mrb[0].mxu0 %v614
    %v777 = vpop.f32.mrb[0].mxu0
    %v778 = vadd.f32 0.0, %v777
    %v779 = vpop.f32.mrb[0].mxu0
    %780 = vmatprep.mubr.f32.mxu0 0.0
    %781 = vmatmul.mubr.f32.gmra.mrb[0].mxu0 %v615
    %v782 = vpop.f32.mrb[0].mxu0
    %v783 = vadd.f32 0.0, %v782
    %v784 = vpop.f32.mrb[0].mxu0
    %785 = vmatprep.mubr.f32.mxu0 0.0
    %786 = vmatmul.mubr.f32.gmra.mrb[0].mxu0 %v616
    %v787 = vpop.f32.mrb[0].mxu0
    %v788 = vadd.f32 0.0, %v787
    %v789 = vpop.f32.mrb[0].mxu0
    %790 = vmatprep.mubr.f32.mxu0 0.0
    %791 = vmatmul.mubr.f32.gmra.mrb[0].mxu0 %v617
    %v792 = vpop.f32.mrb[0].mxu0
    %v793 = vadd.f32 0.0, %v792
    %v794 = vpop.f32.mrb[0].mxu0
    %795 = vmatprep.mubr.f32.mxu0 0.0
    %796 = vmatmul.mubr.f32.gmra.mrb[0].mxu0 %v618
    %v797 = vpop.f32.mrb[0].mxu0
    %v798 = vadd.f32 0.0, %v797
    %v799 = vpop.f32.mrb[0].mxu0
    %800 = vmatprep.mubr.f32.mxu0 0.0
    %801 = vmatmul.mubr.f32.gmra.mrb[0].mxu0 %v619
    %v802 = vpop.f32.mrb[0].mxu0
    %v803 = vadd.f32 0.0, %v802
    %v804 = vpop.f32.mrb[0].mxu0
    %805 = vmatprep.mubr.f32.mxu0 0.0
    %806 = vmatmul.mubr.f32.gmra.mrb[0].mxu0 %v620
    %v807 = vpop.f32.mrb[0].mxu0
    %v808 = vadd.f32 0.0, %v807
    %v809 = vpop.f32.mrb[0].mxu0
    %810 = vmatprep.mubr.f32.mxu0 0.0
    %811 = vmatmul.mubr.f32.gmra.mrb[0].mxu0 %v621
    %v812 = vpop.f32.mrb[0].mxu0
    %v813 = vadd.f32 0.0, %v812
    %v814 = vpop.f32.mrb[0].mxu0
    %815 = vmatprep.mubr.f32.mxu0 0.0
    %816 = vmatmul.mubr.f32.gmra.mrb[0].mxu0 %v622
    %v817 = vpop.f32.mrb[0].mxu0
    %v818 = vadd.f32 0.0, %v817
    %v819 = vpop.f32.mrb[0].mxu0
    %820 = vmatprep.mubr.f32.mxu0 0.0
    %821 = vmatmul.mubr.f32.gmra.mrb[0].mxu0 %v623
    %v822 = vpop.f32.mrb[0].mxu0
    %v823 = vadd.f32 0.0, %v822
    %v824 = vpop.f32.mrb[0].mxu0
    %825 = vmatprep.mubr.f32.mxu0 0.0
    %826 = vmatmul.mubr.f32.gmra.mrb[0].mxu0 %v624
    %v827 = vpop.f32.mrb[0].mxu0
    %v828 = vadd.f32 0.0, %v827
    %v829 = vpop.f32.mrb[0].mxu0
    %830 = vdwg.mxu0
    %831 = vst [vmem:[#allocation8] sm:$0xff] %v708
    %832 = vst [vmem:[#allocation8 + $0x8] sm:$0xff] %v713
    %833 = vst [vmem:[#allocation8 + $0x10] sm:$0xff] %v718
    %834 = vst [vmem:[#allocation8 + $0x18] sm:$0xff] %v723
    %835 = vst [vmem:[#allocation8 + $0x20] sm:$0xff] %v728
    %836 = vst [vmem:[#allocation8 + $0x28] sm:$0xff] %v733
    %837 = vst [vmem:[#allocation8 + $0x30] sm:$0xff] %v738
    %838 = vst [vmem:[#allocation8 + $0x38] sm:$0xff] %v743
    %839 = vst [vmem:[#allocation8 + $0x40] sm:$0xff] %v748
    %840 = vst [vmem:[#allocation8 + $0x48] sm:$0xff] %v753
    %841 = vst [vmem:[#allocation8 + $0x50] sm:$0xff] %v758
    %842 = vst [vmem:[#allocation8 + $0x58] sm:$0xff] %v763
    %843 = vst [vmem:[#allocation8 + $0x60] sm:$0xff] %v768
    %844 = vst [vmem:[#allocation8 + $0x68] sm:$0xff] %v773
    %845 = vst [vmem:[#allocation8 + $0x70] sm:$0xff] %v778
    %846 = vst [vmem:[#allocation8 + $0x78] sm:$0xff] %v783
    %847 = vst [vmem:[#allocation8 + $0x80] sm:$0xff] %v788
    %848 = vst [vmem:[#allocation8 + $0x88] sm:$0xff] %v793
    %849 = vst [vmem:[#allocation8 + $0x90] sm:$0xff] %v798
    %850 = vst [vmem:[#allocation8 + $0x98] sm:$0xff] %v803
    %851 = vst [vmem:[#allocation8 + $0xa0] sm:$0xff] %v808
    %852 = vst [vmem:[#allocation8 + $0xa8] sm:$0xff] %v813
    %853 = vst [vmem:[#allocation8 + $0xb0] sm:$0xff] %v818
    %854 = vst [vmem:[#allocation8 + $0xb8] sm:$0xff] %v823
    %855 = vst [vmem:[#allocation8 + $0xc0] sm:$0xff] %v828
    // Predicated region
    $region34: #{tpu_custom_call.1} parent=1 // pred_check
      _
    $region35: #{tpu_custom_call.1} parent=1 // pred_check_branch
      %857 = sbr.rel (0) target = $region37
    $region36: #{tpu_custom_call.1} parent=1 // pred_region
      %s859 = ssub.s32 3200, 3200
      %860 = vsyncadd [#allocation4], %s859
      %s861 = sshll.u32 [#allocation8], 4
      %s862 = int_to_ptr.vmem [resolvable:$true] %s861
      %867 = dma.vmem_to_hbm [thread:$0]  %s862, 3200, %s5, [#allocation4], 128, 128, 8
    $region37: #{tpu_custom_call.1} parent=1 // pred_fallthru
      _
    // Predicated region
    $region38: #{tpu_custom_call.1} parent=1 // pred_check
      _
    $region39: #{tpu_custom_call.1} parent=1 // pred_check_branch
      %869 = sbr.rel (0) target = $region41
    $region40: #{tpu_custom_call.1} parent=1 // pred_region
      %870 = dma.done [#allocation4], 3200
    $region41: #{tpu_custom_call.1} parent=1 // pred_fallthru
      _
    %871 = vsyncpa [#allocation3], 1
    %872 = vsyncpa [#allocation6], 1
    %873 = vsyncpa [#allocation4], 1

</llo_original>
